<compile_context>
chip_gen: v5e
topology: v5e:2x2
jax: 0.10.0
libtpu: 0.0.40
codegen_flags: <defaults>
</compile_context>

<pallas_src>
import math

import jax
import jax.numpy as jnp
from jax.experimental import pallas as pl
from jax.experimental.pallas import tpu as pltpu

_LANE = 128      # lane width (last dim)
_BATCH_TILE = 128  # M tile for the batched (training/replay) path


def _round_up(x, m):
    return ((x + m - 1) // m) * m


def _fused_mlp_kernel(x_ref, w_ref, b_ref, o_ref, xpad_ref):
    """Whole MLP on one tile of rows.

    x_ref : (M, K)        f32, natural (unpadded) feature width
    w_ref : (L, P, P)     bf16, zero-padded packed weights ([in, out] layout)
    b_ref : (L, 1, P)     f32, zero-padded packed biases
    o_ref : (M, Nout)     f32 output (Nout = output_size or P)
    xpad_ref: (M, P)      f32 VMEM scratch for in-kernel zero-extension
    """
    num_layers, p, _ = w_ref.shape
    m, k = x_ref.shape

    if k == p:
        h = x_ref[...].astype(jnp.float32)
    else:
        # Zero-extend the natural-width input to the padded contraction
        # width inside the kernel (replaces the old XLA-side pad of x).
        # Masked sub-lane stores to a VMEM scratch keep all matmuls aligned.
        xpad_ref[...] = jnp.zeros_like(xpad_ref)
        xpad_ref[:, :k] = x_ref[...].astype(xpad_ref.dtype)
        h = xpad_ref[...]

    for l in range(num_layers):
        w = w_ref[l]                                   # (P, P) bf16, static index
        b = b_ref[l]                                   # (1, P) f32
        h = jnp.dot(h.astype(w.dtype), w,
                    preferred_element_type=jnp.float32) + b
        if l < num_layers - 1:                         # ReLU on all but last layer
            h = jnp.maximum(h, 0.0)

    # For the grid-less inference path o_ref is (M, output_size): slice the
    # valid lanes and store directly (no XLA-side slice).  For the batched
    # path o_ref is (TM, P) -> the slice is a no-op, lane-dense store.
    o_ref[...] = h[:, :o_ref.shape[-1]].astype(o_ref.dtype)


def _fused_mlp_small(x, w_packed, b_packed, output_size):
    """Grid-less fused call for small (inference) batches; zero boundary ops."""
    m = x.shape[0]
    num_layers, p, _ = w_packed.shape
    vmem = lambda: pl.BlockSpec(memory_space=pltpu.MemorySpace.VMEM)
    return pl.pallas_call(
        _fused_mlp_kernel,
        out_shape=jax.ShapeDtypeStruct((m, output_size), jnp.float32),
        in_specs=[vmem(), vmem(), vmem()],
        out_specs=vmem(),
        scratch_shapes=[pltpu.VMEM((m, p), jnp.float32)],
    )(x, w_packed, b_packed)


def _fused_mlp_batched(x, w_packed, b_packed, tm):
    """M-parallel grid for training/replay batches (dual-TC on v7x)."""
    m, k = x.shape
    num_layers, p, _ = w_packed.shape
    mp = _round_up(m, tm)
    if mp != m:
        x = jnp.pad(x, ((0, mp - m), (0, 0)))          # only for ragged last tile
    return pl.pallas_call(
        _fused_mlp_kernel,
        out_shape=jax.ShapeDtypeStruct((mp, p), jnp.float32),
        grid=(mp // tm,),
        in_specs=[
            pl.BlockSpec((tm, k), lambda i: (i, 0)),               # activations tiled
            pl.BlockSpec((num_layers, p, p), lambda i: (0, 0, 0)), # weights resident
            pl.BlockSpec((num_layers, 1, p), lambda i: (0, 0, 0)), # biases resident
        ],
        out_specs=pl.BlockSpec((tm, p), lambda i: (i, 0)),         # lane-dense store
        scratch_shapes=[pltpu.VMEM((tm, p), jnp.float32)],
        compiler_params=pltpu.CompilerParams(
            dimension_semantics=("parallel",)),
    )(x, w_packed, b_packed)


def linear_qnet_forward(params, x, output_size):
    """Forward pass of Linear_QNet (ReLU on all layers except the last)."""
    w_packed, b_packed = params
    squeeze = x.ndim == 1
    if squeeze:
        x = x[None, :]
    m = x.shape[0]
    if m >= _BATCH_TILE:
        out = _fused_mlp_batched(x, w_packed, b_packed, _BATCH_TILE)
        out = out[:m, :output_size]
    else:
        out = _fused_mlp_small(x, w_packed, b_packed, output_size)
    return out[0] if squeeze else out


def make_linear_qnet_params(key, input_size, hidden_sizes, output_size,
                            weight_dtype=jnp.bfloat16):
    """PyTorch nn.Linear-style init (U[-1/sqrt(fan_in), 1/sqrt(fan_in)]).

    Weights stored [in, out] (transpose of nn.Linear), zero-padded to a common
    lane-friendly width P and packed into one (L, P, P) bf16 array; biases are
    packed into one (L, 1, P) f32 array.  Zero padding + ReLU(0)=0 keeps all
    padded lanes exactly 0 through the net, so the math is unchanged.
    """
    if isinstance(hidden_sizes, int):
        hidden_sizes = [hidden_sizes]
    dims = [input_size] + list(hidden_sizes) + [output_size]
    num_layers = len(dims) - 1
    p = _round_up(max(dims), _LANE)

    w_packed = jnp.zeros((num_layers, p, p), weight_dtype)
    b_packed = jnp.zeros((num_layers, 1, p), jnp.float32)
    raw = []
    for i in range(num_layers):
        key, kw, kb = jax.random.split(key, 3)
        fan_in, fan_out = dims[i], dims[i + 1]
        bound = 1.0 / math.sqrt(fan_in)
        w = jax.random.uniform(kw, (fan_in, fan_out), jnp.float32,
                               minval=-bound, maxval=bound)
        b = jax.random.uniform(kb, (fan_out,), jnp.float32,
                               minval=-bound, maxval=bound)
        raw.append((w, b))
        w_packed = w_packed.at[i, :fan_in, :fan_out].set(w.astype(weight_dtype))
        b_packed = b_packed.at[i, 0, :fan_out].set(b)
    return (w_packed, b_packed), raw, dims


# TODO(synk): Linear_QNet.save() (torch.save to ./model) is file I/O, not part
# of the forward pass, and is intentionally not implemented here.


if __name__ == "__main__":
    # Snake-RL-like sizes: 11 input features, two hidden layers, 3 actions.
    input_size, hidden_sizes, output_size = 11, [32, 16], 3

    key = jax.random.PRNGKey(0)
    key_params, key_x1, key_x2 = jax.random.split(key, 3)
    params, raw, dims = make_linear_qnet_params(key_params, input_size,
                                                hidden_sizes, output_size)

    fwd = jax.jit(linear_qnet_forward, static_argnums=(2,))

    def reference(x):
        h = x
        for i, (w, b) in enumerate(raw):
            h = h @ w + b
            if i < len(raw) - 1:
                h = jnp.maximum(h, 0.0)
        return h

    # 1) Inference-like path: small batch, grid-less fused kernel.
    x_small = jax.random.normal(key_x1, (4, input_size), dtype=jnp.float32)
    out_small = jax.block_until_ready(fwd(params, x_small, output_size))
    assert out_small.shape == (4, output_size)
    # bf16 weights -> compare against the f32 reference at ~1e-2 tolerance.
    assert jnp.allclose(out_small, reference(x_small), atol=2e-2, rtol=2e-2)

    # 2) Training/replay-batch path: M-parallel grid.
    x_big = jax.random.normal(key_x2, (512, input_size), dtype=jnp.float32)
    out_big = jax.block_until_ready(fwd(params, x_big, output_size))
    assert out_big.shape == (512, output_size)
    assert jnp.allclose(out_big, reference(x_big), atol=2e-2, rtol=2e-2)

    print("KERNEL_OK")
</pallas_src>

<mosaic_0001>
module attributes {stable_mosaic.version = 11 : i64} {
  func.func @_fused_mlp_kernel(%arg0: memref<4x11xf32, #tpu.memory_space<vmem>>, %arg1: memref<3x128x128xbf16, #tpu.memory_space<vmem>>, %arg2: memref<3x1x128xf32, #tpu.memory_space<vmem>>, %arg3: memref<4x3xf32, #tpu.memory_space<vmem>>, %arg4: memref<4x128xf32, #tpu.memory_space<vmem>>) attributes {dimension_semantics = [], scalar_prefetch = 0 : i64, scratch_operands = 1 : i64, tpu.core_type = #tpu.core_type<tc>} {
    %cst = arith.constant 0.000000e+00 : f32
    %0 = vector.broadcast %cst : f32 to vector<4x128xf32>
    %c0 = arith.constant 0 : index
    %c0_0 = arith.constant 0 : index
    %1 = vector.load %arg4[%c0, %c0_0] : memref<4x128xf32, #tpu.memory_space<vmem>>, vector<4x128xf32>
    tpu.vector_store %arg4[%c0, %c0_0], %0 {strides = array<i32>} : memref<4x128xf32, #tpu.memory_space<vmem>>, vector<4x128xf32>,
    %c0_1 = arith.constant 0 : index
    %c0_2 = arith.constant 0 : index
    %2 = vector.load %arg0[%c0_1, %c0_2] : memref<4x11xf32, #tpu.memory_space<vmem>>, vector<4x11xf32>
    %c0_3 = arith.constant 0 : index
    %c0_4 = arith.constant 0 : index
    %3 = vector.load %arg4[%c0_3, %c0_4] : memref<4x128xf32, #tpu.memory_space<vmem>>, vector<4x11xf32>
    tpu.vector_store %arg4[%c0_3, %c0_4], %2 {strides = array<i32>} : memref<4x128xf32, #tpu.memory_space<vmem>>, vector<4x11xf32>,
    %c0_5 = arith.constant 0 : index
    %c0_6 = arith.constant 0 : index
    %4 = vector.load %arg4[%c0_5, %c0_6] : memref<4x128xf32, #tpu.memory_space<vmem>>, vector<4x128xf32>
    %c0_7 = arith.constant 0 : index
    %c0_8 = arith.constant 0 : index
    %c0_9 = arith.constant 0 : index
    %5 = vector.load %arg1[%c0_7, %c0_8, %c0_9] : memref<3x128x128xbf16, #tpu.memory_space<vmem>>, vector<1x128x128xbf16>
    %6 = vector.shape_cast %5 : vector<1x128x128xbf16> to vector<128x128xbf16>
    %c0_10 = arith.constant 0 : index
    %c0_11 = arith.constant 0 : index
    %c0_12 = arith.constant 0 : index
    %7 = vector.load %arg2[%c0_10, %c0_11, %c0_12] : memref<3x1x128xf32, #tpu.memory_space<vmem>>, vector<1x1x128xf32>
    %8 = vector.shape_cast %7 : vector<1x1x128xf32> to vector<1x128xf32>
    %9 = arith.truncf %4 : vector<4x128xf32> to vector<4x128xbf16>
    %cst_13 = arith.constant dense<0.000000e+00> : vector<4x128xf32>
    %10 = tpu.matmul %9, %6, %cst_13 {dimension_numbers = #tpu.dot_dimension_numbers<[1], [0], [0], [1], [0, 0, 1, 1], [], []>} : vector<4x128xbf16>, vector<128x128xbf16>, vector<4x128xf32> -> vector<4x128xf32>
    %11 = vector.broadcast %8 : vector<1x128xf32> to vector<4x128xf32>
    %12 = arith.addf %10, %11 : vector<4x128xf32>
    %cst_14 = arith.constant 0.000000e+00 : f32
    %13 = vector.broadcast %cst_14 : f32 to vector<4x128xf32>
    %14 = arith.maximumf %12, %13 : vector<4x128xf32>
    %c1 = arith.constant 1 : index
    %c0_15 = arith.constant 0 : index
    %c0_16 = arith.constant 0 : index
    %15 = vector.load %arg1[%c1, %c0_15, %c0_16] : memref<3x128x128xbf16, #tpu.memory_space<vmem>>, vector<1x128x128xbf16>
    %16 = vector.shape_cast %15 : vector<1x128x128xbf16> to vector<128x128xbf16>
    %c1_17 = arith.constant 1 : index
    %c0_18 = arith.constant 0 : index
    %c0_19 = arith.constant 0 : index
    %17 = vector.load %arg2[%c1_17, %c0_18, %c0_19] : memref<3x1x128xf32, #tpu.memory_space<vmem>>, vector<1x1x128xf32>
    %18 = vector.shape_cast %17 : vector<1x1x128xf32> to vector<1x128xf32>
    %19 = arith.truncf %14 : vector<4x128xf32> to vector<4x128xbf16>
    %cst_20 = arith.constant dense<0.000000e+00> : vector<4x128xf32>
    %20 = tpu.matmul %19, %16, %cst_20 {dimension_numbers = #tpu.dot_dimension_numbers<[1], [0], [0], [1], [0, 0, 1, 1], [], []>} : vector<4x128xbf16>, vector<128x128xbf16>, vector<4x128xf32> -> vector<4x128xf32>
    %21 = vector.broadcast %18 : vector<1x128xf32> to vector<4x128xf32>
    %22 = arith.addf %20, %21 : vector<4x128xf32>
    %cst_21 = arith.constant 0.000000e+00 : f32
    %23 = vector.broadcast %cst_21 : f32 to vector<4x128xf32>
    %24 = arith.maximumf %22, %23 : vector<4x128xf32>
    %c2 = arith.constant 2 : index
    %c0_22 = arith.constant 0 : index
    %c0_23 = arith.constant 0 : index
    %25 = vector.load %arg1[%c2, %c0_22, %c0_23] : memref<3x128x128xbf16, #tpu.memory_space<vmem>>, vector<1x128x128xbf16>
    %26 = vector.shape_cast %25 : vector<1x128x128xbf16> to vector<128x128xbf16>
    %c2_24 = arith.constant 2 : index
    %c0_25 = arith.constant 0 : index
    %c0_26 = arith.constant 0 : index
    %27 = vector.load %arg2[%c2_24, %c0_25, %c0_26] : memref<3x1x128xf32, #tpu.memory_space<vmem>>, vector<1x1x128xf32>
    %28 = vector.shape_cast %27 : vector<1x1x128xf32> to vector<1x128xf32>
    %29 = arith.truncf %24 : vector<4x128xf32> to vector<4x128xbf16>
    %cst_27 = arith.constant dense<0.000000e+00> : vector<4x128xf32>
    %30 = tpu.matmul %29, %26, %cst_27 {dimension_numbers = #tpu.dot_dimension_numbers<[1], [0], [0], [1], [0, 0, 1, 1], [], []>} : vector<4x128xbf16>, vector<128x128xbf16>, vector<4x128xf32> -> vector<4x128xf32>
    %31 = vector.broadcast %28 : vector<1x128xf32> to vector<4x128xf32>
    %32 = arith.addf %30, %31 : vector<4x128xf32>
    %33 = vector.extract_strided_slice %32 {offsets = [0, 0], sizes = [4, 3], strides = [1, 1]} : vector<4x128xf32> to vector<4x3xf32>
    %c0_28 = arith.constant 0 : index
    %c0_29 = arith.constant 0 : index
    %34 = vector.load %arg3[%c0_28, %c0_29] : memref<4x3xf32, #tpu.memory_space<vmem>>, vector<4x3xf32>
    tpu.vector_store %arg3[%c0_28, %c0_29], %33 {strides = array<i32>} : memref<4x3xf32, #tpu.memory_space<vmem>>, vector<4x3xf32>,
    return
  }
}

</mosaic_0001>

<llo_original>
// kernel: linear_qnet_forward.1
$region0: #{linear_qnet_forward.1}
  #allocation0 [shape = 'u32[]', space=smem, size = 0x4, offset = 0x4, fixed_abs, tag = 'smem constant byte address 0x4 - core index']
  #allocation1 [shape = 'u32[72,128]{1,0:T(1,128)}', space=vmem, size = 0x9000, scoped, tag = 'internal scratch']
  #allocation2 [shape = 'f32[4,128]{1,0:T(4,128)}', space=vmem, size = 0x800, scoped, tag = 'scratch operand']
  %s0 = inlined_call_operand.hbm [shape: f32[4,11], index: 0, kind: input, shape index: {}]
  %s1 = inlined_call_operand.hbm [shape: bf16[3,128,128], index: 1, kind: input, shape index: {}]
  %s2 = inlined_call_operand.hbm [shape: f32[3,1,128], index: 2, kind: input, shape index: {}]
  %s3 = inlined_call_operand.hbm [shape: f32[4,3], index: 3, kind: output, shape index: {}]
  %s4 = sld [smem:[#allocation0]]
  $region34: #{linear_qnet_forward.1} parent=0
    _
  %s6 = ssub.s32 1, %s4
  %s7 = scalar_select 0, %s6, %s4
  $region1: #{linear_qnet_forward.1} parent=0
    #allocation3 [shape = 'u8[2048]{0}', space=vmem, size = 0x800, scoped, tag = 'input window, operand 0, single buffered']
    #allocation4 [shape = 's32[1]{0}', space=sflag, size = 0x4, scoped, tag = 'scoped memory for linear_qnet_forward.1']
    #allocation5 [shape = 's32[1]{0}', space=sflag, size = 0x4, scoped, tag = 'scoped memory for linear_qnet_forward.1']
    #allocation6 [shape = 'u8[98304]{0}', space=vmem, size = 0x18000, scoped, tag = 'input window, operand 1, single buffered']
    #allocation7 [shape = 's32[1]{0}', space=sflag, size = 0x4, scoped, tag = 'scoped memory for linear_qnet_forward.1']
    #allocation8 [shape = 'u8[1536]{0}', space=vmem, size = 0x800, scoped, tag = 'input window, operand 2, single buffered']
    #allocation9 [shape = 'u8[2048]{0}', space=vmem, size = 0x800, scoped, tag = 'output window, operand 0, single buffered']
    %8 = vsyncpa [#allocation4], 0
    %9 = vsyncpa [#allocation7], 0
    %10 = vsyncpa [#allocation5], 0
    // Predicated region
    $region2: #{linear_qnet_forward.1} parent=1 // pred_check
      _
    $region3: #{linear_qnet_forward.1} parent=1 // pred_check_branch
      %12 = sbr.rel (0) target = $region5
    $region4: #{linear_qnet_forward.1} parent=1 // pred_region
      %14 = vsyncadd [#allocation4], 0
      %s16 = sshll.u32 %s0, 4
      %s17 = int_to_ptr.hbm [resolvable:$true] %s16
      %s18 = sshll.u32 [#allocation3], 4
      %s19 = int_to_ptr.vmem [resolvable:$true] %s18
      %21 = dma.hbm_to_vmem [thread:$0]  %s17, 64, %s19, [#allocation4]
    $region5: #{linear_qnet_forward.1} parent=1 // pred_fallthru
      _
    // Predicated region
    $region6: #{linear_qnet_forward.1} parent=1 // pred_check
      _
    $region7: #{linear_qnet_forward.1} parent=1 // pred_check_branch
      %23 = sbr.rel (0) target = $region9
    $region8: #{linear_qnet_forward.1} parent=1 // pred_region
      %25 = vsyncadd [#allocation7], 0
      %s26 = sshll.u32 %s1, 4
      %s27 = int_to_ptr.hbm [resolvable:$true] %s26
      %s28 = sshll.u32 [#allocation6], 4
      %s29 = int_to_ptr.vmem [resolvable:$true] %s28
      %34 = dma.hbm_to_vmem [thread:$0]  %s27, 3072, %s29, [#allocation7], 64, 64, 4
    $region9: #{linear_qnet_forward.1} parent=1 // pred_fallthru
      _
    // Predicated region
    $region10: #{linear_qnet_forward.1} parent=1 // pred_check
      _
    $region11: #{linear_qnet_forward.1} parent=1 // pred_check_branch
      %36 = sbr.rel (0) target = $region13
    $region12: #{linear_qnet_forward.1} parent=1 // pred_region
      %38 = vsyncadd [#allocation7], 0
      %s39 = sshll.u32 %s2, 4
      %s40 = int_to_ptr.hbm [resolvable:$true] %s39
      %s41 = sshll.u32 [#allocation8], 4
      %s42 = int_to_ptr.vmem [resolvable:$true] %s41
      %47 = dma.hbm_to_vmem [thread:$0]  %s40, 48, %s42, [#allocation7], 16, 16, 1
    $region13: #{linear_qnet_forward.1} parent=1 // pred_fallthru
      _
    // Predicated region
    $region14: #{linear_qnet_forward.1} parent=1 // pred_check
      _
    $region15: #{linear_qnet_forward.1} parent=1 // pred_check_branch
      %49 = sbr.rel (0) target = $region17
    $region16: #{linear_qnet_forward.1} parent=1 // pred_region
      %51 = dma.done [#allocation4], 64
    $region17: #{linear_qnet_forward.1} parent=1 // pred_fallthru
      _
    // Predicated region
    $region18: #{linear_qnet_forward.1} parent=1 // pred_check
      _
    $region19: #{linear_qnet_forward.1} parent=1 // pred_check_branch
      %53 = sbr.rel (0) target = $region21
    $region20: #{linear_qnet_forward.1} parent=1 // pred_region
      %55 = dma.done [#allocation7], 3072
    $region21: #{linear_qnet_forward.1} parent=1 // pred_fallthru
      _
    // Predicated region
    $region22: #{linear_qnet_forward.1} parent=1 // pred_check
      _
    $region23: #{linear_qnet_forward.1} parent=1 // pred_check_branch
      %57 = sbr.rel (0) target = $region25
    $region24: #{linear_qnet_forward.1} parent=1 // pred_region
      %59 = dma.done [#allocation7], 48
    $region25: #{linear_qnet_forward.1} parent=1 // pred_fallthru
      _
    %60 = vst [vmem:[#allocation2] sm:$0xf] 0.0
    %v61 = vld [vmem:[#allocation3] sm:$0xf]
    %vm62 = vcmask 84992
    %63 = vst.msk [vmem:[#allocation2] sm:$0xf] %vm62, %v61
    %v64 = vld [vmem:[#allocation2] sm:$0xf]
    %v65 = vld [vmem:[#allocation6] sm:$0xf]
    %v66 = vld [vmem:[#allocation6 + $0x4] sm:$0xf]
    %v67 = vld [vmem:[#allocation6 + $0x8] sm:$0xf]
    %v68 = vld [vmem:[#allocation6 + $0xc] sm:$0xf]
    %v69 = vld [vmem:[#allocation6 + $0x10] sm:$0xf]
    %v70 = vld [vmem:[#allocation6 + $0x14] sm:$0xf]
    %v71 = vld [vmem:[#allocation6 + $0x18] sm:$0xf]
    %v72 = vld [vmem:[#allocation6 + $0x1c] sm:$0xf]
    %v73 = vld [vmem:[#allocation6 + $0x20] sm:$0xf]
    %v74 = vld [vmem:[#allocation6 + $0x24] sm:$0xf]
    %v75 = vld [vmem:[#allocation6 + $0x28] sm:$0xf]
    %v76 = vld [vmem:[#allocation6 + $0x2c] sm:$0xf]
    %v77 = vld [vmem:[#allocation6 + $0x30] sm:$0xf]
    %v78 = vld [vmem:[#allocation6 + $0x34] sm:$0xf]
    %v79 = vld [vmem:[#allocation6 + $0x38] sm:$0xf]
    %v80 = vld [vmem:[#allocation6 + $0x3c] sm:$0xf]
    %v81 = vld [vmem:[#allocation8] sm:$0x1]
    %v82 = vpack.c.bf16 %v64, %v64
    %v84 = vperm.slane %v81, 0
    %v102 = vunpack.c.l.b16 %v65
    %v103 = vunpack.c.l.b16 %v66
    %v104 = vunpack.c.l.b16 %v67
    %v105 = vunpack.c.l.b16 %v68
    %v106 = vunpack.c.l.b16 %v69
    %v107 = vunpack.c.l.b16 %v70
    %v108 = vunpack.c.l.b16 %v71
    %v109 = vunpack.c.l.b16 %v72
    %v110 = vunpack.c.l.b16 %v73
    %v111 = vunpack.c.l.b16 %v74
    %v112 = vunpack.c.l.b16 %v75
    %v113 = vunpack.c.l.b16 %v76
    %v114 = vunpack.c.l.b16 %v77
    %v115 = vunpack.c.l.b16 %v78
    %v116 = vunpack.c.l.b16 %v79
    %v117 = vunpack.c.l.b16 %v80
    %v118 = vpack.c.b16 %v103, %v102
    %v119 = vpack.c.b16 %v105, %v104
    %v120 = vpack.c.b16 %v107, %v106
    %v121 = vpack.c.b16 %v109, %v108
    %v122 = vpack.c.b16 %v111, %v110
    %v123 = vpack.c.b16 %v113, %v112
    %v124 = vpack.c.b16 %v115, %v114
    %v125 = vpack.c.b16 %v117, %v116
    %134 = vmatpush.bf16.msra.mxu0 %v125
    %135 = vmatpush.bf16.msra.mxu0 %v124
    %136 = vmatpush.bf16.msra.mxu0 %v123
    %137 = vmatpush.bf16.msra.mxu0 %v122
    %138 = vmatpush.bf16.msra.mxu0 %v121
    %139 = vmatpush.bf16.msra.mxu0 %v120
    %140 = vmatpush.bf16.msra.mxu0 %v119
    %141 = vmatpush.bf16.msra.mxu0 %v118
    %142 = vmatmul.bf16.gmra.mxu0 %v82
    %v143 = vpop.f32.mrf.mxu0
    %v144 = vadd.f32 %v84, %v143
    %v145 = vpop.f32.mrf.mxu0
    %146 = vdwg.mxu0
    %v147 = vmax.f32 %v144, 0.0
    %s148 = scalar_lea.vmem [#allocation6], 64
    %v149 = vld [vmem:[%s148] sm:$0xf]
    %v150 = vld [vmem:[%s148 + $0x4] sm:$0xf]
    %v151 = vld [vmem:[%s148 + $0x8] sm:$0xf]
    %v152 = vld [vmem:[%s148 + $0xc] sm:$0xf]
    %v153 = vld [vmem:[%s148 + $0x10] sm:$0xf]
    %v154 = vld [vmem:[%s148 + $0x14] sm:$0xf]
    %v155 = vld [vmem:[%s148 + $0x18] sm:$0xf]
    %v156 = vld [vmem:[%s148 + $0x1c] sm:$0xf]
    %v157 = vld [vmem:[%s148 + $0x20] sm:$0xf]
    %v158 = vld [vmem:[%s148 + $0x24] sm:$0xf]
    %v159 = vld [vmem:[%s148 + $0x28] sm:$0xf]
    %v160 = vld [vmem:[%s148 + $0x2c] sm:$0xf]
    %v161 = vld [vmem:[%s148 + $0x30] sm:$0xf]
    %v162 = vld [vmem:[%s148 + $0x34] sm:$0xf]
    %v163 = vld [vmem:[%s148 + $0x38] sm:$0xf]
    %v164 = vld [vmem:[%s148 + $0x3c] sm:$0xf]
    %s165 = scalar_lea.vmem [#allocation8], 1
    %v166 = vld [vmem:[%s165] sm:$0x1]
    %v167 = vpack.c.bf16 %v147, %v147
    %v169 = vperm.slane %v166, 0
    %v187 = vunpack.c.l.b16 %v149
    %v188 = vunpack.c.l.b16 %v150
    %v189 = vunpack.c.l.b16 %v151
    %v190 = vunpack.c.l.b16 %v152
    %v191 = vunpack.c.l.b16 %v153
    %v192 = vunpack.c.l.b16 %v154
    %v193 = vunpack.c.l.b16 %v155
    %v194 = vunpack.c.l.b16 %v156
    %v195 = vunpack.c.l.b16 %v157
    %v196 = vunpack.c.l.b16 %v158
    %v197 = vunpack.c.l.b16 %v159
    %v198 = vunpack.c.l.b16 %v160
    %v199 = vunpack.c.l.b16 %v161
    %v200 = vunpack.c.l.b16 %v162
    %v201 = vunpack.c.l.b16 %v163
    %v202 = vunpack.c.l.b16 %v164
    %v203 = vpack.c.b16 %v188, %v187
    %v204 = vpack.c.b16 %v190, %v189
    %v205 = vpack.c.b16 %v192, %v191
    %v206 = vpack.c.b16 %v194, %v193
    %v207 = vpack.c.b16 %v196, %v195
    %v208 = vpack.c.b16 %v198, %v197
    %v209 = vpack.c.b16 %v200, %v199
    %v210 = vpack.c.b16 %v202, %v201
    %219 = vmatpush.bf16.msra.mxu0 %v210
    %220 = vmatpush.bf16.msra.mxu0 %v209
    %221 = vmatpush.bf16.msra.mxu0 %v208
    %222 = vmatpush.bf16.msra.mxu0 %v207
    %223 = vmatpush.bf16.msra.mxu0 %v206
    %224 = vmatpush.bf16.msra.mxu0 %v205
    %225 = vmatpush.bf16.msra.mxu0 %v204
    %226 = vmatpush.bf16.msra.mxu0 %v203
    %227 = vmatmul.bf16.gmra.mxu0 %v167
    %v228 = vpop.f32.mrf.mxu0
    %v229 = vadd.f32 %v169, %v228
    %v230 = vpop.f32.mrf.mxu0
    %231 = vdwg.mxu0
    %v232 = vmax.f32 %v229, 0.0
    %s233 = scalar_lea.vmem [#allocation6], 128
    %v234 = vld [vmem:[%s233] sm:$0xf]
    %v235 = vld [vmem:[%s233 + $0x4] sm:$0xf]
    %v236 = vld [vmem:[%s233 + $0x8] sm:$0xf]
    %v237 = vld [vmem:[%s233 + $0xc] sm:$0xf]
    %v238 = vld [vmem:[%s233 + $0x10] sm:$0xf]
    %v239 = vld [vmem:[%s233 + $0x14] sm:$0xf]
    %v240 = vld [vmem:[%s233 + $0x18] sm:$0xf]
    %v241 = vld [vmem:[%s233 + $0x1c] sm:$0xf]
    %v242 = vld [vmem:[%s233 + $0x20] sm:$0xf]
    %v243 = vld [vmem:[%s233 + $0x24] sm:$0xf]
    %v244 = vld [vmem:[%s233 + $0x28] sm:$0xf]
    %v245 = vld [vmem:[%s233 + $0x2c] sm:$0xf]
    %v246 = vld [vmem:[%s233 + $0x30] sm:$0xf]
    %v247 = vld [vmem:[%s233 + $0x34] sm:$0xf]
    %v248 = vld [vmem:[%s233 + $0x38] sm:$0xf]
    %v249 = vld [vmem:[%s233 + $0x3c] sm:$0xf]
    %s250 = scalar_lea.vmem [#allocation8], 2
    %v251 = vld [vmem:[%s250] sm:$0x1]
    %v252 = vpack.c.bf16 %v232, %v232
    %v254 = vperm.slane %v251, 0
    %v272 = vunpack.c.l.b16 %v234
    %v273 = vunpack.c.l.b16 %v235
    %v274 = vunpack.c.l.b16 %v236
    %v275 = vunpack.c.l.b16 %v237
    %v276 = vunpack.c.l.b16 %v238
    %v277 = vunpack.c.l.b16 %v239
    %v278 = vunpack.c.l.b16 %v240
    %v279 = vunpack.c.l.b16 %v241
    %v280 = vunpack.c.l.b16 %v242
    %v281 = vunpack.c.l.b16 %v243
    %v282 = vunpack.c.l.b16 %v244
    %v283 = vunpack.c.l.b16 %v245
    %v284 = vunpack.c.l.b16 %v246
    %v285 = vunpack.c.l.b16 %v247
    %v286 = vunpack.c.l.b16 %v248
    %v287 = vunpack.c.l.b16 %v249
    %v288 = vpack.c.b16 %v273, %v272
    %v289 = vpack.c.b16 %v275, %v274
    %v290 = vpack.c.b16 %v277, %v276
    %v291 = vpack.c.b16 %v279, %v278
    %v292 = vpack.c.b16 %v281, %v280
    %v293 = vpack.c.b16 %v283, %v282
    %v294 = vpack.c.b16 %v285, %v284
    %v295 = vpack.c.b16 %v287, %v286
    %304 = vmatpush.bf16.msra.mxu0 %v295
    %305 = vmatpush.bf16.msra.mxu0 %v294
    %306 = vmatpush.bf16.msra.mxu0 %v293
    %307 = vmatpush.bf16.msra.mxu0 %v292
    %308 = vmatpush.bf16.msra.mxu0 %v291
    %309 = vmatpush.bf16.msra.mxu0 %v290
    %310 = vmatpush.bf16.msra.mxu0 %v289
    %311 = vmatpush.bf16.msra.mxu0 %v288
    %312 = vmatmul.bf16.gmra.mxu0 %v252
    %v313 = vpop.f32.mrf.mxu0
    %v314 = vadd.f32 %v254, %v313
    %v315 = vpop.f32.mrf.mxu0
    %316 = vdwg.mxu0
    %vm317 = vcmask 19456
    %318 = vst.msk [vmem:[#allocation9] sm:$0xf] %vm317, %v314
    // Predicated region
    $region26: #{linear_qnet_forward.1} parent=1 // pred_check
      _
    $region27: #{linear_qnet_forward.1} parent=1 // pred_check_branch
      %320 = sbr.rel (0) target = $region29
    $region28: #{linear_qnet_forward.1} parent=1 // pred_region
      %322 = vsyncadd [#allocation5], 0
      %s324 = sshll.u32 [#allocation9], 4
      %s325 = int_to_ptr.vmem [resolvable:$true] %s324
      %s326 = sshll.u32 %s3, 4
      %s327 = int_to_ptr.hbm [resolvable:$true] %s326
      %329 = dma.vmem_to_hbm [thread:$0]  %s325, 64, %s327, [#allocation5]
    $region29: #{linear_qnet_forward.1} parent=1 // pred_fallthru
      _
    // Predicated region
    $region30: #{linear_qnet_forward.1} parent=1 // pred_check
      _
    $region31: #{linear_qnet_forward.1} parent=1 // pred_check_branch
      %331 = sbr.rel (0) target = $region33
    $region32: #{linear_qnet_forward.1} parent=1 // pred_region
      %333 = dma.done [#allocation5], 64
    $region33: #{linear_qnet_forward.1} parent=1 // pred_fallthru
      _
    %334 = vsyncpa [#allocation4], 1
    %335 = vsyncpa [#allocation7], 1
    %336 = vsyncpa [#allocation5], 1

</llo_original>
